<compile_context>
chip_gen: v7x
topology: tpu7x:2x2x1
jax: 0.10.0
libtpu: 0.0.40
codegen_flags: <defaults>
</compile_context>

<pallas_src>
import functools

import numpy as np
import jax
import jax.numpy as jnp
from jax.experimental import pallas as pl
from jax.experimental.pallas import tpu as pltpu


def _round_up(x: int, m: int) -> int:
    return ((x + m - 1) // m) * m


@functools.lru_cache(maxsize=1)
def _vmem_limit_bytes() -> int:
    # ~75% of physical per-core VMEM (96 MiB on v5e/v6e, 48 MiB on v7x);
    # conservative 48 MiB fallback if the query is unavailable.
    try:
        cap = int(getattr(pltpu.get_tpu_info(), "vmem_capacity_bytes"))
        return max(32 << 20, (cap * 3) // 4)
    except Exception:
        return 48 << 20


def _tile_and_pad(dim: int, cap: int, align: int):
    """Pick (tile, padded_dim). Full-dim blocks need no alignment or padding."""
    if dim <= cap:
        return dim, dim
    cap = max(align, (cap // align) * align)
    return cap, _round_up(dim, cap)


def _sampler_kernel(x_ref, phi_ref, o_ref):
    # x_ref: (tb, tk) bf16, phi_ref: (tk, tm) bf16, o_ref: (tb, tm) f32.
    # The output block index (i, j) does not depend on k, so o_ref stays
    # resident in VMEM across the K grid axis -- accumulate into it directly.
    @pl.when(pl.program_id(2) == 0)
    def _init():
        o_ref[...] = jnp.zeros_like(o_ref)

    o_ref[...] += jnp.dot(
        x_ref[...], phi_ref[...], preferred_element_type=jnp.float32
    )


def _forward(x, phi_t, *, M, N, Mp, Np, tm, tk, compute_dtype, tb_cap=512):
    B = x.shape[0]
    n_in = int(np.prod(x.shape[1:]))
    assert n_in == N, "flattened input dim must equal phi inner dim"

    x_flat = x.reshape(B, N).astype(compute_dtype)

    tb, Bp = _tile_and_pad(B, tb_cap, 8)
    grid_i, grid_j = Bp // tb, Mp // tm

    # v7x: guarantee >= 2 blocks on a 'parallel' axis so both TensorCores get
    # work when the grid would otherwise be a single program (neutral on
    # single-core v5e/v6e).
    if grid_i == 1 and grid_j == 1 and B > 8:
        Bp = _round_up(B, 16)
        tb = Bp // 2
        grid_i = 2

    if (Bp, Np) != (B, N):
        x_flat = jnp.pad(x_flat, ((0, Bp - B), (0, Np - N)))

    grid = (grid_i, grid_j, Np // tk)  # reduction (K) axis last

    in_bytes = jnp.dtype(compute_dtype).itemsize
    cost = pl.CostEstimate(
        flops=2 * Bp * Mp * Np,
        transcendentals=0,
        # x is re-streamed once per M tile, phi once per B tile.
        bytes_accessed=(grid[1] * Bp * Np * in_bytes
                        + grid[0] * Mp * Np * in_bytes
                        + Bp * Mp * 4),
    )

    # TODO(synk): gate to plain jnp.dot when phi is only a few MB and a single
    # grid step would run (dispatch overhead dominates there).
    out_padded = pl.pallas_call(
        _sampler_kernel,
        out_shape=jax.ShapeDtypeStruct((Bp, Mp), jnp.float32),
        grid=grid,
        in_specs=[
            pl.BlockSpec((tb, tk), lambda i, j, k: (i, k)),   # x tile
            # TODO(synk): if a profile shows exposed DMA at large tk, sweep
            # pipeline_mode=pl.Buffered(3) on this phi spec.
            pl.BlockSpec((tk, tm), lambda i, j, k: (k, j)),   # phi.T tile
        ],
        out_specs=pl.BlockSpec((tb, tm), lambda i, j, k: (i, j)),
        compiler_params=pltpu.CompilerParams(
            dimension_semantics=("parallel", "parallel", "arbitrary"),
            vmem_limit_bytes=_vmem_limit_bytes(),
        ),
        cost_estimate=cost,
    )(x_flat, phi_t)

    return out_padded[:B, :M]


class GaussianSampler:
    """Pallas TPU port of the PyTorch GaussianSampler (forward only)."""

    def __init__(self, block_size=8, measurement_ratio=0.25, *, key=None,
                 phi=None, compute_dtype=jnp.bfloat16, tm_cap=1024, tk_cap=1024):
        self.block_size = block_size
        n = block_size ** 2
        m = int(n * measurement_ratio)
        self.measurement_dim = m

        if phi is None:
            if key is None:
                key = jax.random.PRNGKey(0)
            # Matches torch.randn(M, N) / sqrt(N) initialization (fixed param).
            phi = jax.random.normal(key, (m, n), dtype=jnp.float32) / np.sqrt(n)
        phi = jnp.asarray(phi, dtype=jnp.float32)
        assert phi.shape == (m, n)
        self.phi = phi  # f32 reference copy

        # One-time, hoisted phi preparation: transpose to (N, M) for the
        # natural contraction, cast to bf16, pad to the tile grid.
        tk, Np = _tile_and_pad(n, tk_cap, 128)
        tm, Mp = _tile_and_pad(m, tm_cap, 128)
        phi_t = jnp.asarray(phi.T, dtype=compute_dtype)          # (N, M)
        if (Np, Mp) != (n, m):
            phi_t = jnp.pad(phi_t, ((0, Np - n), (0, Mp - m)))
        self._phi_t = phi_t
        self._meta = dict(M=m, N=n, Mp=Mp, Np=Np, tm=tm, tk=tk,
                          compute_dtype=compute_dtype)
        self._fn = jax.jit(lambda x, phi_p: _forward(x, phi_p, **self._meta))

    def __call__(self, x):
        return self._fn(x, self._phi_t)


if __name__ == "__main__":
    block_size = 8
    measurement_ratio = 0.25
    B = 2

    key = jax.random.PRNGKey(0)
    k_phi, k_x = jax.random.split(key)

    sampler = GaussianSampler(block_size, measurement_ratio, key=k_phi)

    # Input: one 8x8 block per image, single channel -> flattens to N = 64.
    x = jax.random.normal(k_x, (B, 1, block_size, block_size), dtype=jnp.float32)

    y = sampler(x)
    jax.block_until_ready(y)

    # Reference check against plain JAX (f32). bf16 inputs with f32
    # accumulation => loosened tolerances.
    y_ref = x.reshape(B, -1) @ sampler.phi.T
    assert y.shape == (B, sampler.measurement_dim)
    np.testing.assert_allclose(np.asarray(y), np.asarray(y_ref),
                               rtol=3e-2, atol=3e-2)

    print("KERNEL_OK")
</pallas_src>

<mosaic_0001>
module attributes {stable_mosaic.version = 11 : i64} {
  func.func @_sampler_kernel(%arg0: i32, %arg1: i32, %arg2: i32, %arg3: memref<2x64xbf16, #tpu.memory_space<vmem>>, %arg4: memref<64x16xbf16, #tpu.memory_space<vmem>>, %arg5: memref<2x16xf32, #tpu.memory_space<vmem>>) attributes {dimension_semantics = [#tpu.dimension_semantics<parallel>, #tpu.dimension_semantics<parallel>, #tpu.dimension_semantics<arbitrary>], iteration_bounds = array<i64: 1, 1, 1>, scalar_prefetch = 0 : i64, scratch_operands = 0 : i64, tpu.core_type = #tpu.core_type<tc>, window_params = [{transform_indices = @transform_0, window_bounds = array<i64: 2, 64>}, {transform_indices = @transform_1, window_bounds = array<i64: 64, 16>}, {transform_indices = @transform_2, window_bounds = array<i64: 2, 16>}]} {
    %c0_i32 = arith.constant 0 : i32
    %0 = arith.cmpi eq, %arg2, %c0_i32 : i32
    %1 = arith.extui %0 : i1 to i32
    %c0_i32_0 = arith.constant 0 : i32
    %2 = arith.cmpi ne, %1, %c0_i32_0 : i32
    scf.if %2 {
      %cst_8 = arith.constant 0.000000e+00 : f32
      %9 = vector.broadcast %cst_8 : f32 to vector<2x16xf32>
      %c0_9 = arith.constant 0 : index
      %c0_10 = arith.constant 0 : index
      %10 = vector.load %arg5[%c0_9, %c0_10] : memref<2x16xf32, #tpu.memory_space<vmem>>, vector<2x16xf32>
      tpu.vector_store %arg5[%c0_9, %c0_10], %9 {strides = array<i32>} : memref<2x16xf32, #tpu.memory_space<vmem>>, vector<2x16xf32>,
    } else {
    }
    %c0 = arith.constant 0 : index
    %c0_1 = arith.constant 0 : index
    %3 = vector.load %arg5[%c0, %c0_1] : memref<2x16xf32, #tpu.memory_space<vmem>>, vector<2x16xf32>
    %c0_2 = arith.constant 0 : index
    %c0_3 = arith.constant 0 : index
    %4 = vector.load %arg3[%c0_2, %c0_3] : memref<2x64xbf16, #tpu.memory_space<vmem>>, vector<2x64xbf16>
    %c0_4 = arith.constant 0 : index
    %c0_5 = arith.constant 0 : index
    %5 = vector.load %arg4[%c0_4, %c0_5] : memref<64x16xbf16, #tpu.memory_space<vmem>>, vector<64x16xbf16>
    %cst = arith.constant dense<0.000000e+00> : vector<2x16xf32>
    %6 = tpu.matmul %4, %5, %cst {dimension_numbers = #tpu.dot_dimension_numbers<[1], [0], [0], [1], [0, 0, 1, 1], [], []>} : vector<2x64xbf16>, vector<64x16xbf16>, vector<2x16xf32> -> vector<2x16xf32>
    %7 = arith.addf %3, %6 : vector<2x16xf32>
    %c0_6 = arith.constant 0 : index
    %c0_7 = arith.constant 0 : index
    %8 = vector.load %arg5[%c0_6, %c0_7] : memref<2x16xf32, #tpu.memory_space<vmem>>, vector<2x16xf32>
    tpu.vector_store %arg5[%c0_6, %c0_7], %7 {strides = array<i32>} : memref<2x16xf32, #tpu.memory_space<vmem>>, vector<2x16xf32>,
    return
  }
  func.func @transform_0(%arg0: i32, %arg1: i32, %arg2: i32) -> (i32, i32) {
    %c0_i32 = arith.constant 0 : i32
    return %arg0, %arg2 : i32, i32
  }
  func.func @transform_1(%arg0: i32, %arg1: i32, %arg2: i32) -> (i32, i32) {
    %c0_i32 = arith.constant 0 : i32
    return %arg2, %arg1 : i32, i32
  }
  func.func @transform_2(%arg0: i32, %arg1: i32, %arg2: i32) -> (i32, i32) {
    %c0_i32 = arith.constant 0 : i32
    return %arg0, %arg1 : i32, i32
  }
}

</mosaic_0001>

<llo_original>
// kernel: _lambda_.1
$region0: #{_lambda_.1}
  #allocation0 [shape = 'u32[]', space=smem, size = 0x4, offset = 0x4, fixed_abs, tag = 'smem constant byte address 0x4 - core index']
  #allocation1 [shape = 'u32[144,128]{1,0:T(1,128)}', space=vmem, size = 0x12000, scoped, tag = 'internal scratch']
  %s0 = inlined_call_operand.vmem [shape: bf16[2,64], index: 0, kind: input, shape index: {}]
  %s1 = inlined_call_operand.vmem [shape: bf16[64,16], index: 1, kind: input, shape index: {}]
  %s2 = inlined_call_operand.hbm [shape: f32[2,16], index: 2, kind: output, shape index: {}]
  %s3 = sld [smem:[#allocation0]]
  $region22: #{_lambda_.1} parent=0
    _
  %s5 = ssub.s32 1, %s3
  %s6 = scalar_select 0, %s5, %s3
  $region1: #{_lambda_.1} parent=0
    #allocation2 [shape = 'u8[1024]{0}', space=vmem, size = 0x400, scoped, tag = 'output window, operand 0, single buffered']
    #allocation3 [shape = 's32[1]{0}', space=sflag, size = 0x4, scoped, tag = 'scoped memory for _lambda_.1']
    %7 = vsyncpa [#allocation3], 0
    // Predicated region
    $region2: #{_lambda_.1} parent=1 // pred_check
      _
    $region3: #{_lambda_.1} parent=1 // pred_check_branch
      %9 = sbr.rel (0) target = $region5
    $region4: #{_lambda_.1} parent=1 // pred_region
      _
    $region5: #{_lambda_.1} parent=1 // pred_fallthru
      _
    // Predicated region
    $region6: #{_lambda_.1} parent=1 // pred_check
      _
    $region7: #{_lambda_.1} parent=1 // pred_check_branch
      %11 = sbr.rel (0) target = $region9
    $region8: #{_lambda_.1} parent=1 // pred_region
      _
    $region9: #{_lambda_.1} parent=1 // pred_fallthru
      _
    %p13 = scmp.eq.s32.totalorder 0, 0
    // Predicated region
    $region10: #{_lambda_.1} parent=1 // pred_check
      %p14 = pneg %p13
    $region11: #{_lambda_.1} parent=1 // pred_check_branch
      %16 = sbr.rel (%p14) target = $region13
    $region12: #{_lambda_.1} parent=1 // pred_region
      %vm17 = vcmask 123904
      %18 = vst.msk [vmem:[#allocation2] sm:$0x3] %vm17, 0.0
    $region13: #{_lambda_.1} parent=1 // pred_fallthru
      _
    %v19 = vld [vmem:[#allocation2] sm:$0x3]
    %v20 = vld [vmem:[%s0] sm:$0x1]
    %v21 = vld [vmem:[%s1] sm:$0xf]
    %v22 = vld [vmem:[%s1 + $0x4] sm:$0xf]
    %v23 = vld [vmem:[%s1 + $0x8] sm:$0xf]
    %v24 = vld [vmem:[%s1 + $0xc] sm:$0xf]
    %v25 = vld [vmem:[%s1 + $0x10] sm:$0xf]
    %v26 = vld [vmem:[%s1 + $0x14] sm:$0xf]
    %v27 = vld [vmem:[%s1 + $0x18] sm:$0xf]
    %v28 = vld [vmem:[%s1 + $0x1c] sm:$0xf]
    %v37 = vunpack.c.l.b16 %v21
    %v38 = vunpack.c.l.b16 %v22
    %v39 = vunpack.c.l.b16 %v23
    %v40 = vunpack.c.l.b16 %v24
    %v41 = vunpack.c.l.b16 %v25
    %v42 = vunpack.c.l.b16 %v26
    %v43 = vunpack.c.l.b16 %v27
    %v44 = vunpack.c.l.b16 %v28
    %v45 = vpack.c.b16 %v38, %v37
    %v46 = vpack.c.b16 %v40, %v39
    %v47 = vpack.c.b16 %v42, %v41
    %v48 = vpack.c.b16 %v44, %v43
    %vm53 = vcmask 523264
    %v55 = vsel %vm53, %v20, 0
    %57 = vmatprep.subr.bf16.mxu0 0
    %58 = vmatpush1.bf16.msra.mxu0 %v45
    %59 = vmatprep.subr.bf16.mxu0 0
    %60 = vmatpush1.bf16.msra.mxu0 %v46
    %61 = vmatprep.subr.bf16.mxu0 0
    %62 = vmatpush1.bf16.msra.mxu0 %v47
    %63 = vmatprep.subr.bf16.mxu0 0
    %64 = vmatpush1.bf16.msra.mxu0 %v48
    %65 = vmatprep.subr.bf16.mxu0 0
    %66 = vmatpush1.bf16.msra.mxu0 0
    %67 = vmatprep.subr.bf16.mxu0 0
    %68 = vmatpush1.bf16.msra.mxu0 0
    %69 = vmatprep.subr.bf16.mxu0 0
    %70 = vmatpush1.bf16.msra.mxu0 0
    %71 = vmatprep.subr.bf16.mxu0 0
    %72 = vmatpush1.bf16.msra.mxu0 0
    %73 = vmatprep.subr.bf16.mxu0 0
    %74 = vmatpush1.bf16.msra.mxu0 0
    %75 = vmatprep.subr.bf16.mxu0 0
    %76 = vmatpush1.bf16.msra.mxu0 0
    %77 = vmatprep.subr.bf16.mxu0 0
    %78 = vmatpush1.bf16.msra.mxu0 0
    %79 = vmatprep.subr.bf16.mxu0 0
    %80 = vmatpush1.bf16.msra.mxu0 0
    %81 = vmatprep.subr.bf16.mxu0 0
    %82 = vmatpush1.bf16.msra.mxu0 0
    %83 = vmatprep.subr.bf16.mxu0 0
    %84 = vmatpush1.bf16.msra.mxu0 0
    %85 = vmatprep.subr.bf16.mxu0 0
    %86 = vmatpush1.bf16.msra.mxu0 0
    %87 = vmatprep.subr.bf16.mxu0 0
    %88 = vmatpush1.bf16.msra.mxu0 0
    %89 = vmatprep.mubr.bf16.mxu0 0
    %90 = vmatmul.mubr.bf16.gmra.mrb[0].mxu0 %v55
    %v91 = vpop.f32.mrb[0].mxu0
    %v92 = vadd.f32 0.0, %v91
    %v93 = vpop.f32.mrb[0].mxu0
    %v94 = vpop.f32.mrb[0].mxu0
    %v95 = vpop.f32.mrb[0].mxu0
    %96 = vdwg.mxu0
    %v97 = vadd.f32 %v19, %v92
    %vm98 = vcmask 123904
    %99 = vst.msk [vmem:[#allocation2] sm:$0x3] %vm98, %v97
    // Predicated region
    $region14: #{_lambda_.1} parent=1 // pred_check
      _
    $region15: #{_lambda_.1} parent=1 // pred_check_branch
      %101 = sbr.rel (0) target = $region17
    $region16: #{_lambda_.1} parent=1 // pred_region
      %s103 = ssub.s32 32, 32
      %104 = vsyncadd [#allocation3], %s103
      %s106 = sshll.u32 [#allocation2], 4
      %s107 = int_to_ptr.vmem [resolvable:$true] %s106
      %109 = dma.vmem_to_hbm [thread:$0]  %s107, 32, %s2, [#allocation3]
    $region17: #{_lambda_.1} parent=1 // pred_fallthru
      _
    // Predicated region
    $region18: #{_lambda_.1} parent=1 // pred_check
      _
    $region19: #{_lambda_.1} parent=1 // pred_check_branch
      %111 = sbr.rel (0) target = $region21
    $region20: #{_lambda_.1} parent=1 // pred_region
      %112 = dma.done [#allocation3], 32
    $region21: #{_lambda_.1} parent=1 // pred_fallthru
      _
    %113 = vsyncpa [#allocation3], 1

</llo_original>
